<compile_context>
chip_gen: v6e
topology: v6e:2x2x1
jax: 0.10.0
libtpu: 0.0.40
codegen_flags: <defaults>
</compile_context>

<pallas_src>
import jax
import jax.numpy as jnp
from jax.experimental import pallas as pl
from jax.experimental.pallas import tpu as pltpu


_LANE = 128                              # vreg lane width
_SUB = 8                                 # f32 sublane tile
_VMEM_BLOCK_BUDGET = 22 * 1024 * 1024    # budget for double-buffered in/out blocks
_VMEM_LIMIT_BYTES = 32 * 1024 * 1024     # scoped-VMEM limit (safe on v5e/v6e/v7x)
_TARGET_BLOCK_BYTES = 4 * 1024 * 1024    # ~4 MiB of logical x per grid step


def _round_up(x, m):
    return ((x + m - 1) // m) * m


def _round_down(x, m):
    return max(m, (x // m) * m)


def _pick_tile(total_rows, cap_rows, target_rows):
    """Rows per grid step: multi-MiB blocks, VMEM-capped, >=2 steps when possible."""
    t = min(cap_rows, target_rows)
    if total_rows <= t:
        # One block would suffice; still split in two so both TensorCores of a
        # dual-TC chip (v7x) get work.  Tiny inputs stay single-block.
        if total_rows <= _SUB:
            return total_rows
        return _round_up((total_rows + 1) // 2, _SUB)
    return t


# ---------------------------------------------------------------------------
# Path A: lane-packed kernel for small D (128 % D == 0), e.g. D = 32.
# ---------------------------------------------------------------------------
def _packed_kernel(x_ref, wt_ref, sel_ref, b_ref, o_ref):
    # x_ref:  (TR, 128) f32 -- 128//D batch rows packed per row (lane-dense)
    # wt_ref: (1, 128)  f32 -- weight row tiled 128//D times
    # sel_ref:(128, G)  f32 -- 0/1 segment-membership matrix
    # b_ref:  (1,)      f32 -- bias scalar in SMEM
    prod = x_ref[...] * wt_ref[...]                       # VPU, exact f32
    # Segmented 128//D-way lane reduction + compaction to G dense output lanes
    # in one MXU op.  sel is 0/1 and accumulation is f32, so with HIGHEST
    # precision this is exact (no bf16 rounding of prod).
    logits = jnp.dot(prod, sel_ref[...],
                     precision=jax.lax.Precision.HIGHEST,
                     preferred_element_type=jnp.float32)  # (TR, G)
    o_ref[...] = jax.nn.sigmoid(logits + b_ref[0]).astype(o_ref.dtype)


def _forward_packed(x, w, b):
    B, D = x.shape
    G = _LANE // D                        # batch rows per packed row
    B_pad = _round_up(B, G)
    if B_pad != B:
        x = jnp.pad(x, ((0, B_pad - B), (0, 0)))
    R = B_pad // G
    xp = x.reshape(R, _LANE)              # free, layout-preserving reshape
    wt = jnp.tile(w, (1, G))              # (1, 128) lane-dense weights
    sel = (jnp.arange(_LANE, dtype=jnp.int32)[:, None] // D
           == jnp.arange(G, dtype=jnp.int32)[None, :]).astype(jnp.float32)

    # Packed x rows are exactly 128 f32 lanes (512 B, zero lane-padding waste);
    # the (TR, G) output block pads G -> 128 lanes in VMEM, so it costs the same
    # per row.  Budget 2 double-buffered input + 2 output buffers.
    per_row_bytes = 4 * (_LANE * 4)
    cap = _round_down(_VMEM_BLOCK_BUDGET // per_row_bytes, _SUB)
    target = _round_down(_TARGET_BLOCK_BYTES // (_LANE * 4), _SUB)
    TR = _pick_tile(R, cap, target)
    grid = (pl.cdiv(R, TR),)

    out = pl.pallas_call(
        _packed_kernel,
        out_shape=jax.ShapeDtypeStruct((R, G), jnp.float32),
        grid=grid,
        in_specs=[
            pl.BlockSpec((TR, _LANE), lambda i: (i, 0)),          # packed x (batch-tiled)
            pl.BlockSpec((1, _LANE), lambda i: (0, 0)),           # tiled weight (grid-invariant)
            pl.BlockSpec((_LANE, G), lambda i: (0, 0)),           # 0/1 reduce matrix (grid-invariant)
            pl.BlockSpec(memory_space=pltpu.MemorySpace.SMEM),    # bias scalar
        ],
        out_specs=pl.BlockSpec((TR, G), lambda i: (i, 0)),
        compiler_params=pltpu.CompilerParams(
            dimension_semantics=("parallel",),
            vmem_limit_bytes=_VMEM_LIMIT_BYTES),
    )(xp, wt, sel, b)

    return out.reshape(B_pad, 1)[:B]


# ---------------------------------------------------------------------------
# Path B: general-D fallback (MXU matvec, K-tiled reduction for very large D).
# ---------------------------------------------------------------------------
def _general_kernel(x_ref, w_ref, b_ref, o_ref, acc_ref):
    k = pl.program_id(1)

    @pl.when(k == 0)
    def _init():
        acc_ref[...] = jnp.zeros_like(acc_ref)

    acc_ref[...] += jnp.dot(x_ref[...], w_ref[...],
                            precision=jax.lax.Precision.HIGHEST,
                            preferred_element_type=jnp.float32)

    @pl.when(k == pl.num_programs(1) - 1)
    def _finalize():
        o_ref[...] = jax.nn.sigmoid(acc_ref[...] + b_ref[0]).astype(o_ref.dtype)


def _forward_general(x, w, b):
    B, D = x.shape
    # K tiling: single K block for moderate D; 512-wide zero-padded K tiles for
    # very large D so the double-buffered x block stays within the VMEM budget.
    if D <= 512:
        TK = Dp = D
    else:
        TK = 512
        Dp = _round_up(D, TK)
        if Dp != D:
            x = jnp.pad(x, ((0, 0), (0, Dp - D)))
            w = jnp.pad(w, ((0, 0), (0, Dp - D)))
    w_col = w.reshape(Dp, 1)
    nk = Dp // TK

    TKp = _round_up(TK, _LANE)                      # padded lane footprint of x block
    per_row_bytes = 2 * TKp * 4 + 3 * _LANE * 4     # 2x in + (2x out + acc), lane-padded
    w_bytes = 2 * TK * _LANE * 4                    # (TK, 1) weight blocks, lane-padded
    cap = _round_down((_VMEM_BLOCK_BUDGET - w_bytes) // per_row_bytes, _SUB)
    target = _round_down(max(_SUB, _TARGET_BLOCK_BYTES // (TKp * 4)), _SUB)
    TB = _pick_tile(B, cap, target)
    grid = (pl.cdiv(B, TB), nk)

    return pl.pallas_call(
        _general_kernel,
        out_shape=jax.ShapeDtypeStruct((B, 1), jnp.float32),
        grid=grid,
        in_specs=[
            pl.BlockSpec((TB, TK), lambda i, k: (i, k)),          # x
            pl.BlockSpec((TK, 1), lambda i, k: (k, 0)),           # weight column
            pl.BlockSpec(memory_space=pltpu.MemorySpace.SMEM),    # bias scalar
        ],
        out_specs=pl.BlockSpec((TB, 1), lambda i, k: (i, 0)),
        scratch_shapes=[pltpu.VMEM((TB, 1), jnp.float32)],
        compiler_params=pltpu.CompilerParams(
            dimension_semantics=("parallel", "arbitrary"),
            vmem_limit_bytes=_VMEM_LIMIT_BYTES),
    )(x, w_col, b)


@jax.jit
def discriminator_forward(x, w, b):
    """Discriminator forward: sigmoid(x @ w.T + b).

    x: [B, 2*latent_dim] f32
    w: [1, 2*latent_dim] f32  (PyTorch nn.Linear [out, in] layout, kept as-is)
    b: [1] f32
    returns: [B, 1] f32
    """
    B, D = x.shape
    assert w.shape == (1, D) and b.shape == (1,)
    if D <= _LANE and _LANE % D == 0:
        return _forward_packed(x, w, b)
    return _forward_general(x, w, b)


def init_params(latent_dim, key):
    """Deterministic synthetic init matching nn.Linear(2*latent_dim, 1) shapes."""
    in_features = 2 * latent_dim
    kw, kb = jax.random.split(key)
    bound = 1.0 / jnp.sqrt(in_features)
    w = jax.random.uniform(kw, (1, in_features), jnp.float32, -bound, bound)
    b = jax.random.uniform(kb, (1,), jnp.float32, -bound, bound)
    return w, b


def _reference(x, w, b):
    return jax.nn.sigmoid(
        jnp.dot(x, w.T, precision=jax.lax.Precision.HIGHEST) + b)


if __name__ == "__main__":
    key = jax.random.PRNGKey(0)

    # 1) Spec-sized config (latent_dim=16 -> fc in-features 32): lane-packed path.
    latent_dim, batch = 16, 8
    kx, kp, key = jax.random.split(key, 3)
    x = jax.random.normal(kx, (batch, 2 * latent_dim), jnp.float32)
    w, b = init_params(latent_dim, kp)
    out = jax.block_until_ready(discriminator_forward(x, w, b))
    assert out.shape == (batch, 1)
    assert jnp.allclose(out, _reference(x, w, b), atol=1e-5, rtol=1e-5)

    # 2) Batch not divisible by 128//D: exercises row padding, a multi-step grid
    #    (>=2 blocks -> both v7x TensorCores) and a partial final block.
    batch2 = 2002
    kx2, key = jax.random.split(key)
    x2 = jax.random.normal(kx2, (batch2, 2 * latent_dim), jnp.float32)
    out2 = jax.block_until_ready(discriminator_forward(x2, w, b))
    assert out2.shape == (batch2, 1)
    assert jnp.allclose(out2, _reference(x2, w, b), atol=1e-5, rtol=1e-5)

    # 3) Large in-features (latent_dim=320 -> D=640): general MXU path with a
    #    zero-padded, K-tiled reduction axis and an f32 accumulator.
    latent_dim3, batch3 = 320, 16
    kx3, kp3 = jax.random.split(key)
    x3 = jax.random.normal(kx3, (batch3, 2 * latent_dim3), jnp.float32)
    w3, b3 = init_params(latent_dim3, kp3)
    out3 = jax.block_until_ready(discriminator_forward(x3, w3, b3))
    assert out3.shape == (batch3, 1)
    assert jnp.allclose(out3, _reference(x3, w3, b3), atol=1e-5, rtol=1e-5)

    print("KERNEL_OK")
</pallas_src>

<mosaic_0001>
module attributes {stable_mosaic.version = 11 : i64} {
  func.func @_packed_kernel(%arg0: i32, %arg1: memref<2x128xf32, #tpu.memory_space<vmem>>, %arg2: memref<1x128xf32, #tpu.memory_space<vmem>>, %arg3: memref<128x4xf32, #tpu.memory_space<vmem>>, %arg4: memref<1xf32, #tpu.memory_space<smem>>, %arg5: memref<2x4xf32, #tpu.memory_space<vmem>>) attributes {dimension_semantics = [#tpu.dimension_semantics<parallel>], iteration_bounds = array<i64: 1>, scalar_prefetch = 0 : i64, scratch_operands = 0 : i64, tpu.core_type = #tpu.core_type<tc>, window_params = [{transform_indices = @transform_0, window_bounds = array<i64: 2, 128>}, {pipeline_mode = #tpu.pipeline_mode<synchronous>, transform_indices = @transform_1, window_bounds = array<i64: 1, 128>}, {pipeline_mode = #tpu.pipeline_mode<synchronous>, transform_indices = @transform_2, window_bounds = array<i64: 128, 4>}, {transform_indices = @transform_3, window_bounds = array<i64: 1>}, {transform_indices = @transform_4, window_bounds = array<i64: 2, 4>}]} {
    %c0 = arith.constant 0 : index
    %c0_0 = arith.constant 0 : index
    %0 = vector.load %arg1[%c0, %c0_0] : memref<2x128xf32, #tpu.memory_space<vmem>>, vector<2x128xf32>
    %c0_1 = arith.constant 0 : index
    %c0_2 = arith.constant 0 : index
    %1 = vector.load %arg2[%c0_1, %c0_2] : memref<1x128xf32, #tpu.memory_space<vmem>>, vector<1x128xf32>
    %2 = vector.broadcast %1 : vector<1x128xf32> to vector<2x128xf32>
    %3 = arith.mulf %0, %2 : vector<2x128xf32>
    %c0_3 = arith.constant 0 : index
    %c0_4 = arith.constant 0 : index
    %4 = vector.load %arg3[%c0_3, %c0_4] : memref<128x4xf32, #tpu.memory_space<vmem>>, vector<128x4xf32>
    %cst = arith.constant dense<0.000000e+00> : vector<2x4xf32>
    %5 = tpu.matmul %3, %4, %cst {dimension_numbers = #tpu.dot_dimension_numbers<[1], [0], [0], [1], [0, 0, 1, 1], [], []>, precision = #tpu.contract_precision<fp32>} : vector<2x128xf32>, vector<128x4xf32>, vector<2x4xf32> -> vector<2x4xf32>
    %c0_5 = arith.constant 0 : index
    %6 = memref.load %arg4[%c0_5] : memref<1xf32, #tpu.memory_space<smem>>
    %7 = vector.broadcast %6 : f32 to vector<2x4xf32>
    %8 = arith.addf %5, %7 : vector<2x4xf32>
    %9 = arith.negf %8 : vector<2x4xf32>
    %10 = math.exp %9 : vector<2x4xf32>
    %cst_6 = arith.constant 1.000000e+00 : f32
    %11 = vector.broadcast %cst_6 : f32 to vector<2x4xf32>
    %12 = arith.addf %11, %10 : vector<2x4xf32>
    %13 = arith.divf %11, %12 : vector<2x4xf32>
    %c0_7 = arith.constant 0 : index
    %c0_8 = arith.constant 0 : index
    %14 = vector.load %arg5[%c0_7, %c0_8] : memref<2x4xf32, #tpu.memory_space<vmem>>, vector<2x4xf32>
    tpu.vector_store %arg5[%c0_7, %c0_8], %13 {strides = array<i32>} : memref<2x4xf32, #tpu.memory_space<vmem>>, vector<2x4xf32>,
    return
  }
  func.func @transform_0(%arg0: i32) -> (i32, i32) {
    %c0_i32 = arith.constant 0 : i32
    %c0_i32_0 = arith.constant 0 : i32
    return %arg0, %c0_i32 : i32, i32
  }
  func.func @transform_1(%arg0: i32) -> (i32, i32) {
    %c0_i32 = arith.constant 0 : i32
    %c0_i32_0 = arith.constant 0 : i32
    %c0_i32_1 = arith.constant 0 : i32
    return %c0_i32, %c0_i32_0 : i32, i32
  }
  func.func @transform_2(%arg0: i32) -> (i32, i32) {
    %c0_i32 = arith.constant 0 : i32
    %c0_i32_0 = arith.constant 0 : i32
    %c0_i32_1 = arith.constant 0 : i32
    return %c0_i32, %c0_i32_0 : i32, i32
  }
  func.func @transform_3(%arg0: i32) -> i32 {
    %c0_i32 = arith.constant 0 : i32
    %c0_i32_0 = arith.constant 0 : i32
    return %c0_i32 : i32
  }
  func.func @transform_4(%arg0: i32) -> (i32, i32) {
    %c0_i32 = arith.constant 0 : i32
    %c0_i32_0 = arith.constant 0 : i32
    return %arg0, %c0_i32 : i32, i32
  }
}

</mosaic_0001>

<llo_original>
// kernel: discriminator_forward.1
$region0: #{discriminator_forward.1}
  #allocation0 [shape = 'u32[]', space=smem, size = 0x4, offset = 0x4, fixed_abs, tag = 'smem constant byte address 0x4 - core index']
  #allocation1 [shape = 'u32[144,128]{1,0:T(1,128)}', space=vmem, size = 0x12000, scoped, tag = 'internal scratch']
  #allocation2 [shape = 'f32[1]{0:T(128)S(6)}', space=smem, size = 0x200, scoped, tag = 'scoped memory for discriminator_forward.1']
  %s0 = inlined_call_operand.vmem [shape: f32[2,128], index: 0, kind: input, shape index: {}]
  %s1 = inlined_call_operand.vmem [shape: f32[1,128], index: 1, kind: input, shape index: {}]
  %s2 = inlined_call_operand.vmem [shape: f32[128,4], index: 2, kind: input, shape index: {}]
  %s3 = inlined_call_operand.<no memory space> [shape: f32[1], index: 3, kind: input, shape index: {}]
  %s4 = inlined_call_operand.vmem [shape: f32[2,4], index: 4, kind: output, shape index: {}]
  %s5 = sld [smem:[#allocation0]]
  $region26: #{discriminator_forward.1} parent=0
    _
  %s7 = ssub.s32 1, %s5
  %s8 = scalar_select 0, %s7, %s5
  %9 = sst [smem:[#allocation2]] %s3
  // Predicated region
  $region2: #{discriminator_forward.1} parent=0 // pred_check
    _
  $region3: #{discriminator_forward.1} parent=0 // pred_check_branch
    %11 = sbr.rel (0) target = $region5
  $region4: #{discriminator_forward.1} parent=0 // pred_region
    _
  $region5: #{discriminator_forward.1} parent=0 // pred_fallthru
    _
  // Predicated region
  $region6: #{discriminator_forward.1} parent=0 // pred_check
    _
  $region7: #{discriminator_forward.1} parent=0 // pred_check_branch
    %13 = sbr.rel (0) target = $region9
  $region8: #{discriminator_forward.1} parent=0 // pred_region
    _
  $region9: #{discriminator_forward.1} parent=0 // pred_fallthru
    _
  // Predicated region
  $region10: #{discriminator_forward.1} parent=0 // pred_check
    _
  $region11: #{discriminator_forward.1} parent=0 // pred_check_branch
    %15 = sbr.rel (0) target = $region13
  $region12: #{discriminator_forward.1} parent=0 // pred_region
    _
  $region13: #{discriminator_forward.1} parent=0 // pred_fallthru
    _
  // Predicated region
  $region14: #{discriminator_forward.1} parent=0 // pred_check
    _
  $region15: #{discriminator_forward.1} parent=0 // pred_check_branch
    %17 = sbr.rel (0) target = $region17
  $region16: #{discriminator_forward.1} parent=0 // pred_region
    _
  $region17: #{discriminator_forward.1} parent=0 // pred_fallthru
    _
  %v18 = vld [vmem:[%s0] sm:$0x3]
  %v19 = vld [vmem:[%s1] sm:$0x1]
  %v21 = vlaneseq
  %v22 = vshrl.u32 %v21, 7
  %v23 = vsub.s32 0, %v22
  %v24 = vrot.slane %v19, %v23
  %v26 = vmul.f32 %v18, %v24
  %v27 = vld [vmem:[%s2] sm:$0xff]
  %v28 = vld [vmem:[%s2 + $0x8] sm:$0xff]
  %v29 = vld [vmem:[%s2 + $0x10] sm:$0xff]
  %v30 = vld [vmem:[%s2 + $0x18] sm:$0xff]
  %v31 = vld [vmem:[%s2 + $0x20] sm:$0xff]
  %v32 = vld [vmem:[%s2 + $0x28] sm:$0xff]
  %v33 = vld [vmem:[%s2 + $0x30] sm:$0xff]
  %v34 = vld [vmem:[%s2 + $0x38] sm:$0xff]
  %v35 = vld [vmem:[%s2 + $0x40] sm:$0xff]
  %v36 = vld [vmem:[%s2 + $0x48] sm:$0xff]
  %v37 = vld [vmem:[%s2 + $0x50] sm:$0xff]
  %v38 = vld [vmem:[%s2 + $0x58] sm:$0xff]
  %v39 = vld [vmem:[%s2 + $0x60] sm:$0xff]
  %v40 = vld [vmem:[%s2 + $0x68] sm:$0xff]
  %v41 = vld [vmem:[%s2 + $0x70] sm:$0xff]
  %v42 = vld [vmem:[%s2 + $0x78] sm:$0xff]
  %s43 = sld [smem:[#allocation2]]
  %v44 = vstv %s43
  %45 = vmatprep.subr.mxu0 0.0
  %v46 = vand.u32 %v42, 4294901760
  %47 = vmatpush1.msra.mxu0 %v46
  %48 = vmatprep.subr.mxu0 0.0
  %v49 = vand.u32 %v41, 4294901760
  %50 = vmatpush1.msra.mxu0 %v49
  %51 = vmatprep.subr.mxu0 0.0
  %v52 = vand.u32 %v40, 4294901760
  %53 = vmatpush1.msra.mxu0 %v52
  %54 = vmatprep.subr.mxu0 0.0
  %v55 = vand.u32 %v39, 4294901760
  %56 = vmatpush1.msra.mxu0 %v55
  %57 = vmatprep.subr.mxu0 0.0
  %v58 = vand.u32 %v38, 4294901760
  %59 = vmatpush1.msra.mxu0 %v58
  %60 = vmatprep.subr.mxu0 0.0
  %v61 = vand.u32 %v37, 4294901760
  %62 = vmatpush1.msra.mxu0 %v61
  %63 = vmatprep.subr.mxu0 0.0
  %v64 = vand.u32 %v36, 4294901760
  %65 = vmatpush1.msra.mxu0 %v64
  %66 = vmatprep.subr.mxu0 0.0
  %v67 = vand.u32 %v35, 4294901760
  %68 = vmatpush1.msra.mxu0 %v67
  %69 = vmatprep.subr.mxu0 0.0
  %v70 = vand.u32 %v34, 4294901760
  %71 = vmatpush1.msra.mxu0 %v70
  %72 = vmatprep.subr.mxu0 0.0
  %v73 = vand.u32 %v33, 4294901760
  %74 = vmatpush1.msra.mxu0 %v73
  %75 = vmatprep.subr.mxu0 0.0
  %v76 = vand.u32 %v32, 4294901760
  %77 = vmatpush1.msra.mxu0 %v76
  %78 = vmatprep.subr.mxu0 0.0
  %v79 = vand.u32 %v31, 4294901760
  %80 = vmatpush1.msra.mxu0 %v79
  %81 = vmatprep.subr.mxu0 0.0
  %v82 = vand.u32 %v30, 4294901760
  %83 = vmatpush1.msra.mxu0 %v82
  %84 = vmatprep.subr.mxu0 0.0
  %v85 = vand.u32 %v29, 4294901760
  %86 = vmatpush1.msra.mxu0 %v85
  %87 = vmatprep.subr.mxu0 0.0
  %v88 = vand.u32 %v28, 4294901760
  %89 = vmatpush1.msra.mxu0 %v88
  %90 = vmatprep.subr.mxu0 0.0
  %v91 = vand.u32 %v27, 4294901760
  %92 = vmatpush1.msra.mxu0 %v91
  %93 = vmatprep.subr.mxu0 0.0
  %94 = vmatpush2.msra.mxu0 0.0
  %95 = vmatprep.subr.mxu0 0.0
  %96 = vmatpush2.msra.mxu0 0.0
  %97 = vmatprep.subr.mxu0 0.0
  %98 = vmatpush2.msra.mxu0 0.0
  %99 = vmatprep.subr.mxu0 0.0
  %100 = vmatpush2.msra.mxu0 0.0
  %101 = vmatprep.subr.mxu0 0.0
  %102 = vmatpush2.msra.mxu0 0.0
  %103 = vmatprep.subr.mxu0 0.0
  %104 = vmatpush2.msra.mxu0 0.0
  %105 = vmatprep.subr.mxu0 0.0
  %106 = vmatpush2.msra.mxu0 0.0
  %107 = vmatprep.subr.mxu0 0.0
  %108 = vmatpush2.msra.mxu0 0.0
  %109 = vmatprep.subr.mxu0 0.0
  %110 = vmatpush2.msra.mxu0 0.0
  %111 = vmatprep.subr.mxu0 0.0
  %112 = vmatpush2.msra.mxu0 0.0
  %113 = vmatprep.subr.mxu0 0.0
  %114 = vmatpush2.msra.mxu0 0.0
  %115 = vmatprep.subr.mxu0 0.0
  %116 = vmatpush2.msra.mxu0 0.0
  %117 = vmatprep.subr.mxu0 0.0
  %118 = vmatpush2.msra.mxu0 0.0
  %119 = vmatprep.subr.mxu0 0.0
  %120 = vmatpush2.msra.mxu0 0.0
  %121 = vmatprep.subr.mxu0 0.0
  %122 = vmatpush2.msra.mxu0 0.0
  %123 = vmatprep.subr.mxu0 0.0
  %124 = vmatpush2.msra.mxu0 0.0
  %125 = vmatprep.mubr.f32.mxu0 0.0
  %v126 = vand.u32 %v26, 4294901760
  %v127 = vsub.f32 %v26, %v126
  %v128 = vand.u32 %v127, 4294901760
  %v129 = vsub.f32 %v127, %v128
  %v130 = vand.u32 %v129, 4294901760
  %131 = vmatmul.mubr.f32.gmra.mxu0 %v130
  %v132 = vpop.f32.mrf.mxu0
  %v133 = vadd.f32 %v44, %v132
  %v134 = vpop.f32.mrf.mxu0
  %135 = vdwg.mxu0
  %136 = vmatprep.subr.mxu0 0.0
  %v137 = vand.u32 %v42, 4294901760
  %v138 = vsub.f32 %v42, %v137
  %v139 = vand.u32 %v138, 4294901760
  %v140 = vsub.f32 %v138, %v139
  %v141 = vand.u32 %v140, 4294901760
  %142 = vmatpush1.msra.mxu0 %v141
  %143 = vmatprep.subr.mxu0 0.0
  %v144 = vand.u32 %v41, 4294901760
  %v145 = vsub.f32 %v41, %v144
  %v146 = vand.u32 %v145, 4294901760
  %v147 = vsub.f32 %v145, %v146
  %v148 = vand.u32 %v147, 4294901760
  %149 = vmatpush1.msra.mxu0 %v148
  %150 = vmatprep.subr.mxu0 0.0
  %v151 = vand.u32 %v40, 4294901760
  %v152 = vsub.f32 %v40, %v151
  %v153 = vand.u32 %v152, 4294901760
  %v154 = vsub.f32 %v152, %v153
  %v155 = vand.u32 %v154, 4294901760
  %156 = vmatpush1.msra.mxu0 %v155
  %157 = vmatprep.subr.mxu0 0.0
  %v158 = vand.u32 %v39, 4294901760
  %v159 = vsub.f32 %v39, %v158
  %v160 = vand.u32 %v159, 4294901760
  %v161 = vsub.f32 %v159, %v160
  %v162 = vand.u32 %v161, 4294901760
  %163 = vmatpush1.msra.mxu0 %v162
  %164 = vmatprep.subr.mxu0 0.0
  %v165 = vand.u32 %v38, 4294901760
  %v166 = vsub.f32 %v38, %v165
  %v167 = vand.u32 %v166, 4294901760
  %v168 = vsub.f32 %v166, %v167
  %v169 = vand.u32 %v168, 4294901760
  %170 = vmatpush1.msra.mxu0 %v169
  %171 = vmatprep.subr.mxu0 0.0
  %v172 = vand.u32 %v37, 4294901760
  %v173 = vsub.f32 %v37, %v172
  %v174 = vand.u32 %v173, 4294901760
  %v175 = vsub.f32 %v173, %v174
  %v176 = vand.u32 %v175, 4294901760
  %177 = vmatpush1.msra.mxu0 %v176
  %178 = vmatprep.subr.mxu0 0.0
  %v179 = vand.u32 %v36, 4294901760
  %v180 = vsub.f32 %v36, %v179
  %v181 = vand.u32 %v180, 4294901760
  %v182 = vsub.f32 %v180, %v181
  %v183 = vand.u32 %v182, 4294901760
  %184 = vmatpush1.msra.mxu0 %v183
  %185 = vmatprep.subr.mxu0 0.0
  %v186 = vand.u32 %v35, 4294901760
  %v187 = vsub.f32 %v35, %v186
  %v188 = vand.u32 %v187, 4294901760
  %v189 = vsub.f32 %v187, %v188
  %v190 = vand.u32 %v189, 4294901760
  %191 = vmatpush1.msra.mxu0 %v190
  %192 = vmatprep.subr.mxu0 0.0
  %v193 = vand.u32 %v34, 4294901760
  %v194 = vsub.f32 %v34, %v193
  %v195 = vand.u32 %v194, 4294901760
  %v196 = vsub.f32 %v194, %v195
  %v197 = vand.u32 %v196, 4294901760
  %198 = vmatpush1.msra.mxu0 %v197
  %199 = vmatprep.subr.mxu0 0.0
  %v200 = vand.u32 %v33, 4294901760
  %v201 = vsub.f32 %v33, %v200
  %v202 = vand.u32 %v201, 4294901760
  %v203 = vsub.f32 %v201, %v202
  %v204 = vand.u32 %v203, 4294901760
  %205 = vmatpush1.msra.mxu0 %v204
  %206 = vmatprep.subr.mxu0 0.0
  %v207 = vand.u32 %v32, 4294901760
  %v208 = vsub.f32 %v32, %v207
  %v209 = vand.u32 %v208, 4294901760
  %v210 = vsub.f32 %v208, %v209
  %v211 = vand.u32 %v210, 4294901760
  %212 = vmatpush1.msra.mxu0 %v211
  %213 = vmatprep.subr.mxu0 0.0
  %v214 = vand.u32 %v31, 4294901760
  %v215 = vsub.f32 %v31, %v214
  %v216 = vand.u32 %v215, 4294901760
  %v217 = vsub.f32 %v215, %v216
  %v218 = vand.u32 %v217, 4294901760
  %219 = vmatpush1.msra.mxu0 %v218
  %220 = vmatprep.subr.mxu0 0.0
  %v221 = vand.u32 %v30, 4294901760
  %v222 = vsub.f32 %v30, %v221
  %v223 = vand.u32 %v222, 4294901760
  %v224 = vsub.f32 %v222, %v223
  %v225 = vand.u32 %v224, 4294901760
  %226 = vmatpush1.msra.mxu0 %v225
  %227 = vmatprep.subr.mxu0 0.0
  %v228 = vand.u32 %v29, 4294901760
  %v229 = vsub.f32 %v29, %v228
  %v230 = vand.u32 %v229, 4294901760
  %v231 = vsub.f32 %v229, %v230
  %v232 = vand.u32 %v231, 4294901760
  %233 = vmatpush1.msra.mxu0 %v232
  %234 = vmatprep.subr.mxu0 0.0
  %v235 = vand.u32 %v28, 4294901760
  %v236 = vsub.f32 %v28, %v235
  %v237 = vand.u32 %v236, 4294901760
  %v238 = vsub.f32 %v236, %v237
  %v239 = vand.u32 %v238, 4294901760
  %240 = vmatpush1.msra.mxu0 %v239
  %241 = vmatprep.subr.mxu0 0.0
  %v242 = vand.u32 %v27, 4294901760
  %v243 = vsub.f32 %v27, %v242
  %v244 = vand.u32 %v243, 4294901760
  %v245 = vsub.f32 %v243, %v244
  %v246 = vand.u32 %v245, 4294901760
  %247 = vmatpush1.msra.mxu0 %v246
  %248 = vmatprep.subr.mxu0 0.0
  %249 = vmatpush2.msra.mxu0 0.0
  %250 = vmatprep.subr.mxu0 0.0
  %251 = vmatpush2.msra.mxu0 0.0
  %252 = vmatprep.subr.mxu0 0.0
  %253 = vmatpush2.msra.mxu0 0.0
  %254 = vmatprep.subr.mxu0 0.0
  %255 = vmatpush2.msra.mxu0 0.0
  %256 = vmatprep.subr.mxu0 0.0
  %257 = vmatpush2.msra.mxu0 0.0
  %258 = vmatprep.subr.mxu0 0.0
  %259 = vmatpush2.msra.mxu0 0.0
  %260 = vmatprep.subr.mxu0 0.0
  %261 = vmatpush2.msra.mxu0 0.0
  %262 = vmatprep.subr.mxu0 0.0
  %263 = vmatpush2.msra.mxu0 0.0
  %264 = vmatprep.subr.mxu0 0.0
  %265 = vmatpush2.msra.mxu0 0.0
  %266 = vmatprep.subr.mxu0 0.0
  %267 = vmatpush2.msra.mxu0 0.0
  %268 = vmatprep.subr.mxu0 0.0
  %269 = vmatpush2.msra.mxu0 0.0
  %270 = vmatprep.subr.mxu0 0.0
  %271 = vmatpush2.msra.mxu0 0.0
  %272 = vmatprep.subr.mxu0 0.0
  %273 = vmatpush2.msra.mxu0 0.0
  %274 = vmatprep.subr.mxu0 0.0
  %275 = vmatpush2.msra.mxu0 0.0
  %276 = vmatprep.subr.mxu0 0.0
  %277 = vmatpush2.msra.mxu0 0.0
  %278 = vmatprep.subr.mxu0 0.0
  %279 = vmatpush2.msra.mxu0 0.0
  %280 = vmatprep.mubr.f32.mxu0 0.0
  %v281 = vand.u32 %v26, 4294901760
  %282 = vmatmul.mubr.f32.gmra.mxu0 %v281
  %v283 = vpop.f32.mrf.mxu0
  %v284 = vadd.f32 %v133, %v283
  %v285 = vpop.f32.mrf.mxu0
  %286 = vdwg.mxu0
  %287 = vmatprep.subr.mxu0 0.0
  %v288 = vand.u32 %v42, 4294901760
  %v289 = vsub.f32 %v42, %v288
  %290 = vmatpush1.msra.mxu0 %v289
  %291 = vmatprep.subr.mxu0 0.0
  %v292 = vand.u32 %v41, 4294901760
  %v293 = vsub.f32 %v41, %v292
  %294 = vmatpush1.msra.mxu0 %v293
  %295 = vmatprep.subr.mxu0 0.0
  %v296 = vand.u32 %v40, 4294901760
  %v297 = vsub.f32 %v40, %v296
  %298 = vmatpush1.msra.mxu0 %v297
  %299 = vmatprep.subr.mxu0 0.0
  %v300 = vand.u32 %v39, 4294901760
  %v301 = vsub.f32 %v39, %v300
  %302 = vmatpush1.msra.mxu0 %v301
  %303 = vmatprep.subr.mxu0 0.0
  %v304 = vand.u32 %v38, 4294901760
  %v305 = vsub.f32 %v38, %v304
  %306 = vmatpush1.msra.mxu0 %v305
  %307 = vmatprep.subr.mxu0 0.0
  %v308 = vand.u32 %v37, 4294901760
  %v309 = vsub.f32 %v37, %v308
  %310 = vmatpush1.msra.mxu0 %v309
  %311 = vmatprep.subr.mxu0 0.0
  %v312 = vand.u32 %v36, 4294901760
  %v313 = vsub.f32 %v36, %v312
  %314 = vmatpush1.msra.mxu0 %v313
  %315 = vmatprep.subr.mxu0 0.0
  %v316 = vand.u32 %v35, 4294901760
  %v317 = vsub.f32 %v35, %v316
  %318 = vmatpush1.msra.mxu0 %v317
  %319 = vmatprep.subr.mxu0 0.0
  %v320 = vand.u32 %v34, 4294901760
  %v321 = vsub.f32 %v34, %v320
  %322 = vmatpush1.msra.mxu0 %v321
  %323 = vmatprep.subr.mxu0 0.0
  %v324 = vand.u32 %v33, 4294901760
  %v325 = vsub.f32 %v33, %v324
  %326 = vmatpush1.msra.mxu0 %v325
  %327 = vmatprep.subr.mxu0 0.0
  %v328 = vand.u32 %v32, 4294901760
  %v329 = vsub.f32 %v32, %v328
  %330 = vmatpush1.msra.mxu0 %v329
  %331 = vmatprep.subr.mxu0 0.0
  %v332 = vand.u32 %v31, 4294901760
  %v333 = vsub.f32 %v31, %v332
  %334 = vmatpush1.msra.mxu0 %v333
  %335 = vmatprep.subr.mxu0 0.0
  %v336 = vand.u32 %v30, 4294901760
  %v337 = vsub.f32 %v30, %v336
  %338 = vmatpush1.msra.mxu0 %v337
  %339 = vmatprep.subr.mxu0 0.0
  %v340 = vand.u32 %v29, 4294901760
  %v341 = vsub.f32 %v29, %v340
  %342 = vmatpush1.msra.mxu0 %v341
  %343 = vmatprep.subr.mxu0 0.0
  %v344 = vand.u32 %v28, 4294901760
  %v345 = vsub.f32 %v28, %v344
  %346 = vmatpush1.msra.mxu0 %v345
  %347 = vmatprep.subr.mxu0 0.0
  %v348 = vand.u32 %v27, 4294901760
  %v349 = vsub.f32 %v27, %v348
  %350 = vmatpush1.msra.mxu0 %v349
  %351 = vmatprep.subr.mxu0 0.0
  %352 = vmatpush2.msra.mxu0 0.0
  %353 = vmatprep.subr.mxu0 0.0
  %354 = vmatpush2.msra.mxu0 0.0
  %355 = vmatprep.subr.mxu0 0.0
  %356 = vmatpush2.msra.mxu0 0.0
  %357 = vmatprep.subr.mxu0 0.0
  %358 = vmatpush2.msra.mxu0 0.0
  %359 = vmatprep.subr.mxu0 0.0
  %360 = vmatpush2.msra.mxu0 0.0
  %361 = vmatprep.subr.mxu0 0.0
  %362 = vmatpush2.msra.mxu0 0.0
  %363 = vmatprep.subr.mxu0 0.0
  %364 = vmatpush2.msra.mxu0 0.0
  %365 = vmatprep.subr.mxu0 0.0
  %366 = vmatpush2.msra.mxu0 0.0
  %367 = vmatprep.subr.mxu0 0.0
  %368 = vmatpush2.msra.mxu0 0.0
  %369 = vmatprep.subr.mxu0 0.0
  %370 = vmatpush2.msra.mxu0 0.0
  %371 = vmatprep.subr.mxu0 0.0
  %372 = vmatpush2.msra.mxu0 0.0
  %373 = vmatprep.subr.mxu0 0.0
  %374 = vmatpush2.msra.mxu0 0.0
  %375 = vmatprep.subr.mxu0 0.0
  %376 = vmatpush2.msra.mxu0 0.0
  %377 = vmatprep.subr.mxu0 0.0
  %378 = vmatpush2.msra.mxu0 0.0
  %379 = vmatprep.subr.mxu0 0.0
  %380 = vmatpush2.msra.mxu0 0.0
  %381 = vmatprep.subr.mxu0 0.0
  %382 = vmatpush2.msra.mxu0 0.0
  %383 = vmatprep.mubr.f32.mxu0 0.0
  %v384 = vand.u32 %v26, 4294901760
  %v385 = vsub.f32 %v26, %v384
  %386 = vmatmul.mubr.f32.gmra.mxu0 %v385
  %v387 = vpop.f32.mrf.mxu0
  %v388 = vadd.f32 %v284, %v387
  %v389 = vpop.f32.mrf.mxu0
  %390 = vdwg.mxu0
  %391 = vmatprep.subr.mxu0 0.0
  %v392 = vand.u32 %v42, 4294901760
  %393 = vmatpush1.msra.mxu0 %v392
  %394 = vmatprep.subr.mxu0 0.0
  %v395 = vand.u32 %v41, 4294901760
  %396 = vmatpush1.msra.mxu0 %v395
  %397 = vmatprep.subr.mxu0 0.0
  %v398 = vand.u32 %v40, 4294901760
  %399 = vmatpush1.msra.mxu0 %v398
  %400 = vmatprep.subr.mxu0 0.0
  %v401 = vand.u32 %v39, 4294901760
  %402 = vmatpush1.msra.mxu0 %v401
  %403 = vmatprep.subr.mxu0 0.0
  %v404 = vand.u32 %v38, 4294901760
  %405 = vmatpush1.msra.mxu0 %v404
  %406 = vmatprep.subr.mxu0 0.0
  %v407 = vand.u32 %v37, 4294901760
  %408 = vmatpush1.msra.mxu0 %v407
  %409 = vmatprep.subr.mxu0 0.0
  %v410 = vand.u32 %v36, 4294901760
  %411 = vmatpush1.msra.mxu0 %v410
  %412 = vmatprep.subr.mxu0 0.0
  %v413 = vand.u32 %v35, 4294901760
  %414 = vmatpush1.msra.mxu0 %v413
  %415 = vmatprep.subr.mxu0 0.0
  %v416 = vand.u32 %v34, 4294901760
  %417 = vmatpush1.msra.mxu0 %v416
  %418 = vmatprep.subr.mxu0 0.0
  %v419 = vand.u32 %v33, 4294901760
  %420 = vmatpush1.msra.mxu0 %v419
  %421 = vmatprep.subr.mxu0 0.0
  %v422 = vand.u32 %v32, 4294901760
  %423 = vmatpush1.msra.mxu0 %v422
  %424 = vmatprep.subr.mxu0 0.0
  %v425 = vand.u32 %v31, 4294901760
  %426 = vmatpush1.msra.mxu0 %v425
  %427 = vmatprep.subr.mxu0 0.0
  %v428 = vand.u32 %v30, 4294901760
  %429 = vmatpush1.msra.mxu0 %v428
  %430 = vmatprep.subr.mxu0 0.0
  %v431 = vand.u32 %v29, 4294901760
  %432 = vmatpush1.msra.mxu0 %v431
  %433 = vmatprep.subr.mxu0 0.0
  %v434 = vand.u32 %v28, 4294901760
  %435 = vmatpush1.msra.mxu0 %v434
  %436 = vmatprep.subr.mxu0 0.0
  %v437 = vand.u32 %v27, 4294901760
  %438 = vmatpush1.msra.mxu0 %v437
  %439 = vmatprep.subr.mxu0 0.0
  %440 = vmatpush2.msra.mxu0 0.0
  %441 = vmatprep.subr.mxu0 0.0
  %442 = vmatpush2.msra.mxu0 0.0
  %443 = vmatprep.subr.mxu0 0.0
  %444 = vmatpush2.msra.mxu0 0.0
  %445 = vmatprep.subr.mxu0 0.0
  %446 = vmatpush2.msra.mxu0 0.0
  %447 = vmatprep.subr.mxu0 0.0
  %448 = vmatpush2.msra.mxu0 0.0
  %449 = vmatprep.subr.mxu0 0.0
  %450 = vmatpush2.msra.mxu0 0.0
  %451 = vmatprep.subr.mxu0 0.0
  %452 = vmatpush2.msra.mxu0 0.0
  %453 = vmatprep.subr.mxu0 0.0
  %454 = vmatpush2.msra.mxu0 0.0
  %455 = vmatprep.subr.mxu0 0.0
  %456 = vmatpush2.msra.mxu0 0.0
  %457 = vmatprep.subr.mxu0 0.0
  %458 = vmatpush2.msra.mxu0 0.0
  %459 = vmatprep.subr.mxu0 0.0
  %460 = vmatpush2.msra.mxu0 0.0
  %461 = vmatprep.subr.mxu0 0.0
  %462 = vmatpush2.msra.mxu0 0.0
  %463 = vmatprep.subr.mxu0 0.0
  %464 = vmatpush2.msra.mxu0 0.0
  %465 = vmatprep.subr.mxu0 0.0
  %466 = vmatpush2.msra.mxu0 0.0
  %467 = vmatprep.subr.mxu0 0.0
  %468 = vmatpush2.msra.mxu0 0.0
  %469 = vmatprep.subr.mxu0 0.0
  %470 = vmatpush2.msra.mxu0 0.0
  %471 = vmatprep.mubr.f32.mxu0 0.0
  %v472 = vand.u32 %v26, 4294901760
  %v473 = vsub.f32 %v26, %v472
  %v474 = vand.u32 %v473, 4294901760
  %475 = vmatmul.mubr.f32.gmra.mxu0 %v474
  %v476 = vpop.f32.mrf.mxu0
  %v477 = vadd.f32 %v388, %v476
  %v478 = vpop.f32.mrf.mxu0
  %479 = vdwg.mxu0
  %480 = vmatprep.subr.mxu0 0.0
  %v481 = vand.u32 %v42, 4294901760
  %v482 = vsub.f32 %v42, %v481
  %v483 = vand.u32 %v482, 4294901760
  %484 = vmatpush1.msra.mxu0 %v483
  %485 = vmatprep.subr.mxu0 0.0
  %v486 = vand.u32 %v41, 4294901760
  %v487 = vsub.f32 %v41, %v486
  %v488 = vand.u32 %v487, 4294901760
  %489 = vmatpush1.msra.mxu0 %v488
  %490 = vmatprep.subr.mxu0 0.0
  %v491 = vand.u32 %v40, 4294901760
  %v492 = vsub.f32 %v40, %v491
  %v493 = vand.u32 %v492, 4294901760
  %494 = vmatpush1.msra.mxu0 %v493
  %495 = vmatprep.subr.mxu0 0.0
  %v496 = vand.u32 %v39, 4294901760
  %v497 = vsub.f32 %v39, %v496
  %v498 = vand.u32 %v497, 4294901760
  %499 = vmatpush1.msra.mxu0 %v498
  %500 = vmatprep.subr.mxu0 0.0
  %v501 = vand.u32 %v38, 4294901760
  %v502 = vsub.f32 %v38, %v501
  %v503 = vand.u32 %v502, 4294901760
  %504 = vmatpush1.msra.mxu0 %v503
  %505 = vmatprep.subr.mxu0 0.0
  %v506 = vand.u32 %v37, 4294901760
  %v507 = vsub.f32 %v37, %v506
  %v508 = vand.u32 %v507, 4294901760
  %509 = vmatpush1.msra.mxu0 %v508
  %510 = vmatprep.subr.mxu0 0.0
  %v511 = vand.u32 %v36, 4294901760
  %v512 = vsub.f32 %v36, %v511
  %v513 = vand.u32 %v512, 4294901760
  %514 = vmatpush1.msra.mxu0 %v513
  %515 = vmatprep.subr.mxu0 0.0
  %v516 = vand.u32 %v35, 4294901760
  %v517 = vsub.f32 %v35, %v516
  %v518 = vand.u32 %v517, 4294901760
  %519 = vmatpush1.msra.mxu0 %v518
  %520 = vmatprep.subr.mxu0 0.0
  %v521 = vand.u32 %v34, 4294901760
  %v522 = vsub.f32 %v34, %v521
  %v523 = vand.u32 %v522, 4294901760
  %524 = vmatpush1.msra.mxu0 %v523
  %525 = vmatprep.subr.mxu0 0.0
  %v526 = vand.u32 %v33, 4294901760
  %v527 = vsub.f32 %v33, %v526
  %v528 = vand.u32 %v527, 4294901760
  %529 = vmatpush1.msra.mxu0 %v528
  %530 = vmatprep.subr.mxu0 0.0
  %v531 = vand.u32 %v32, 4294901760
  %v532 = vsub.f32 %v32, %v531
  %v533 = vand.u32 %v532, 4294901760
  %534 = vmatpush1.msra.mxu0 %v533
  %535 = vmatprep.subr.mxu0 0.0
  %v536 = vand.u32 %v31, 4294901760
  %v537 = vsub.f32 %v31, %v536
  %v538 = vand.u32 %v537, 4294901760
  %539 = vmatpush1.msra.mxu0 %v538
  %540 = vmatprep.subr.mxu0 0.0
  %v541 = vand.u32 %v30, 4294901760
  %v542 = vsub.f32 %v30, %v541
  %v543 = vand.u32 %v542, 4294901760
  %544 = vmatpush1.msra.mxu0 %v543
  %545 = vmatprep.subr.mxu0 0.0
  %v546 = vand.u32 %v29, 4294901760
  %v547 = vsub.f32 %v29, %v546
  %v548 = vand.u32 %v547, 4294901760
  %549 = vmatpush1.msra.mxu0 %v548
  %550 = vmatprep.subr.mxu0 0.0
  %v551 = vand.u32 %v28, 4294901760
  %v552 = vsub.f32 %v28, %v551
  %v553 = vand.u32 %v552, 4294901760
  %554 = vmatpush1.msra.mxu0 %v553
  %555 = vmatprep.subr.mxu0 0.0
  %v556 = vand.u32 %v27, 4294901760
  %v557 = vsub.f32 %v27, %v556
  %v558 = vand.u32 %v557, 4294901760
  %559 = vmatpush1.msra.mxu0 %v558
  %560 = vmatprep.subr.mxu0 0.0
  %561 = vmatpush2.msra.mxu0 0.0
  %562 = vmatprep.subr.mxu0 0.0
  %563 = vmatpush2.msra.mxu0 0.0
  %564 = vmatprep.subr.mxu0 0.0
  %565 = vmatpush2.msra.mxu0 0.0
  %566 = vmatprep.subr.mxu0 0.0
  %567 = vmatpush2.msra.mxu0 0.0
  %568 = vmatprep.subr.mxu0 0.0
  %569 = vmatpush2.msra.mxu0 0.0
  %570 = vmatprep.subr.mxu0 0.0
  %571 = vmatpush2.msra.mxu0 0.0
  %572 = vmatprep.subr.mxu0 0.0
  %573 = vmatpush2.msra.mxu0 0.0
  %574 = vmatprep.subr.mxu0 0.0
  %575 = vmatpush2.msra.mxu0 0.0
  %576 = vmatprep.subr.mxu0 0.0
  %577 = vmatpush2.msra.mxu0 0.0
  %578 = vmatprep.subr.mxu0 0.0
  %579 = vmatpush2.msra.mxu0 0.0
  %580 = vmatprep.subr.mxu0 0.0
  %581 = vmatpush2.msra.mxu0 0.0
  %582 = vmatprep.subr.mxu0 0.0
  %583 = vmatpush2.msra.mxu0 0.0
  %584 = vmatprep.subr.mxu0 0.0
  %585 = vmatpush2.msra.mxu0 0.0
  %586 = vmatprep.subr.mxu0 0.0
  %587 = vmatpush2.msra.mxu0 0.0
  %588 = vmatprep.subr.mxu0 0.0
  %589 = vmatpush2.msra.mxu0 0.0
  %590 = vmatprep.subr.mxu0 0.0
  %591 = vmatpush2.msra.mxu0 0.0
  %592 = vmatprep.mubr.f32.mxu0 0.0
  %v593 = vand.u32 %v26, 4294901760
  %594 = vmatmul.mubr.f32.gmra.mxu0 %v593
  %v595 = vpop.f32.mrf.mxu0
  %v596 = vadd.f32 %v477, %v595
  %v597 = vpop.f32.mrf.mxu0
  %598 = vdwg.mxu0
  %599 = vmatprep.subr.mxu0 0.0
  %v600 = vand.u32 %v42, 4294901760
  %601 = vmatpush1.msra.mxu0 %v600
  %602 = vmatprep.subr.mxu0 0.0
  %v603 = vand.u32 %v41, 4294901760
  %604 = vmatpush1.msra.mxu0 %v603
  %605 = vmatprep.subr.mxu0 0.0
  %v606 = vand.u32 %v40, 4294901760
  %607 = vmatpush1.msra.mxu0 %v606
  %608 = vmatprep.subr.mxu0 0.0
  %v609 = vand.u32 %v39, 4294901760
  %610 = vmatpush1.msra.mxu0 %v609
  %611 = vmatprep.subr.mxu0 0.0
  %v612 = vand.u32 %v38, 4294901760
  %613 = vmatpush1.msra.mxu0 %v612
  %614 = vmatprep.subr.mxu0 0.0
  %v615 = vand.u32 %v37, 4294901760
  %616 = vmatpush1.msra.mxu0 %v615
  %617 = vmatprep.subr.mxu0 0.0
  %v618 = vand.u32 %v36, 4294901760
  %619 = vmatpush1.msra.mxu0 %v618
  %620 = vmatprep.subr.mxu0 0.0
  %v621 = vand.u32 %v35, 4294901760
  %622 = vmatpush1.msra.mxu0 %v621
  %623 = vmatprep.subr.mxu0 0.0
  %v624 = vand.u32 %v34, 4294901760
  %625 = vmatpush1.msra.mxu0 %v624
  %626 = vmatprep.subr.mxu0 0.0
  %v627 = vand.u32 %v33, 4294901760
  %628 = vmatpush1.msra.mxu0 %v627
  %629 = vmatprep.subr.mxu0 0.0
  %v630 = vand.u32 %v32, 4294901760
  %631 = vmatpush1.msra.mxu0 %v630
  %632 = vmatprep.subr.mxu0 0.0
  %v633 = vand.u32 %v31, 4294901760
  %634 = vmatpush1.msra.mxu0 %v633
  %635 = vmatprep.subr.mxu0 0.0
  %v636 = vand.u32 %v30, 4294901760
  %637 = vmatpush1.msra.mxu0 %v636
  %638 = vmatprep.subr.mxu0 0.0
  %v639 = vand.u32 %v29, 4294901760
  %640 = vmatpush1.msra.mxu0 %v639
  %641 = vmatprep.subr.mxu0 0.0
  %v642 = vand.u32 %v28, 4294901760
  %643 = vmatpush1.msra.mxu0 %v642
  %644 = vmatprep.subr.mxu0 0.0
  %v645 = vand.u32 %v27, 4294901760
  %646 = vmatpush1.msra.mxu0 %v645
  %647 = vmatprep.subr.mxu0 0.0
  %648 = vmatpush2.msra.mxu0 0.0
  %649 = vmatprep.subr.mxu0 0.0
  %650 = vmatpush2.msra.mxu0 0.0
  %651 = vmatprep.subr.mxu0 0.0
  %652 = vmatpush2.msra.mxu0 0.0
  %653 = vmatprep.subr.mxu0 0.0
  %654 = vmatpush2.msra.mxu0 0.0
  %655 = vmatprep.subr.mxu0 0.0
  %656 = vmatpush2.msra.mxu0 0.0
  %657 = vmatprep.subr.mxu0 0.0
  %658 = vmatpush2.msra.mxu0 0.0
  %659 = vmatprep.subr.mxu0 0.0
  %660 = vmatpush2.msra.mxu0 0.0
  %661 = vmatprep.subr.mxu0 0.0
  %662 = vmatpush2.msra.mxu0 0.0
  %663 = vmatprep.subr.mxu0 0.0
  %664 = vmatpush2.msra.mxu0 0.0
  %665 = vmatprep.subr.mxu0 0.0
  %666 = vmatpush2.msra.mxu0 0.0
  %667 = vmatprep.subr.mxu0 0.0
  %668 = vmatpush2.msra.mxu0 0.0
  %669 = vmatprep.subr.mxu0 0.0
  %670 = vmatpush2.msra.mxu0 0.0
  %671 = vmatprep.subr.mxu0 0.0
  %672 = vmatpush2.msra.mxu0 0.0
  %673 = vmatprep.subr.mxu0 0.0
  %674 = vmatpush2.msra.mxu0 0.0
  %675 = vmatprep.subr.mxu0 0.0
  %676 = vmatpush2.msra.mxu0 0.0
  %677 = vmatprep.subr.mxu0 0.0
  %678 = vmatpush2.msra.mxu0 0.0
  %679 = vmatprep.mubr.f32.mxu0 0.0
  %v680 = vand.u32 %v26, 4294901760
  %681 = vmatmul.mubr.f32.gmra.mxu0 %v680
  %v682 = vpop.f32.mrf.mxu0
  %v683 = vadd.f32 %v596, %v682
  %v684 = vpop.f32.mrf.mxu0
  %685 = vdwg.mxu0
  %v686 = vxor.u32 %v683, 2147483648
  %v687 = vmul.f32 %v686, 1.442695
  %v688 = vpow.pop %v687
  %v689 = vadd.f32 %v688, 1.0
  %v690 = vrcp.pop %v689
  %v691 = vmul.f32 1.0, %v690
  %vm692 = vcmask 25600
  %693 = vst.msk [vmem:[%s4] sm:$0x3] %vm692, %v691
  // Predicated region
  $region18: #{discriminator_forward.1} parent=0 // pred_check
    _
  $region19: #{discriminator_forward.1} parent=0 // pred_check_branch
    %695 = sbr.rel (0) target = $region21
  $region20: #{discriminator_forward.1} parent=0 // pred_region
    _
  $region21: #{discriminator_forward.1} parent=0 // pred_fallthru
    _
  // Predicated region
  $region22: #{discriminator_forward.1} parent=0 // pred_check
    _
  $region23: #{discriminator_forward.1} parent=0 // pred_check_branch
    %697 = sbr.rel (0) target = $region25
  $region24: #{discriminator_forward.1} parent=0 // pred_region
    _
  $region25: #{discriminator_forward.1} parent=0 // pred_fallthru
    _

</llo_original>
